<compile_context>
chip_gen: v7x
topology: tpu7x:2x2x1
jax: 0.10.0
libtpu: 0.0.40
codegen_flags: <defaults>
</compile_context>

<pallas_src>
import functools

import jax
import jax.numpy as jnp
from jax.experimental import pallas as pl
from jax.experimental.pallas import tpu as pltpu


def _rmsnorm_kernel(x_ref, w_ref, o_ref, *, eps):
    # x_ref: (row_tile, D) tile, w_ref: (1, D), o_ref: (row_tile, D)
    x = x_ref[...]
    xf = x.astype(jnp.float32)
    var = jnp.mean(xf * xf, axis=-1, keepdims=True)
    inv = jax.lax.rsqrt(var + eps)
    y = xf * inv
    w = w_ref[...]
    # HF T5LayerNorm casts the normalized states to the weight dtype before
    # the elementwise multiply when the weight is half precision.
    if w_ref.dtype in (jnp.float16, jnp.bfloat16):
        y = y.astype(w_ref.dtype)
    o_ref[...] = (y * w).astype(o_ref.dtype)


def _choose_row_tile(n_rows, d_model, itemsize, *,
                     target_block_bytes=2 * 1024 * 1024,
                     vmem_budget_bytes=24 * 1024 * 1024):
    """Pick a row tile: ~2 MiB blocks, multiple of the sublane packing, and
    small enough that double-buffered in/out blocks + f32 temps fit VMEM on
    every TPU generation (incl. v7x's 64 MiB / 32 MiB scoped default)."""
    sublane = max(8, 32 // max(int(itemsize), 1))  # 8 f32, 16 bf16, 32 i8
    row_bytes = d_model * itemsize
    # Per-row VMEM cost: 2x double-buffered input + output blocks plus ~2
    # float32 temporaries the kernel materializes.
    per_row_vmem = d_model * (4 * itemsize + 8)
    max_rows_vmem = max(sublane, vmem_budget_bytes // per_row_vmem)
    tile = max(sublane, target_block_bytes // max(row_bytes, 1))
    tile = min(tile, max_rows_vmem)
    n_up = ((n_rows + sublane - 1) // sublane) * sublane
    tile = min(tile, n_up)
    tile = max(sublane, (tile // sublane) * sublane)
    return int(tile)


def switch_final_layer_norm(hidden_states, weight, *, eps=1e-6, row_tile=None):
    """RMSNorm over the last dim of (..., D) hidden states via Pallas."""
    orig_shape = hidden_states.shape
    D = orig_shape[-1]
    N = 1
    for s in orig_shape[:-1]:
        N *= int(s)

    x2d = hidden_states.reshape(N, D)
    w2d = weight.reshape(1, D)

    itemsize = jnp.dtype(hidden_states.dtype).itemsize
    if row_tile is None:
        row_tile = _choose_row_tile(N, D, itemsize)

    num_tiles = pl.cdiv(N, row_tile)
    n_pad = num_tiles * row_tile
    if n_pad != N:
        # Pad the row axis; padded rows compute harmless values and are
        # sliced away below (writes to them never escape the slice).
        x2d = jnp.pad(x2d, ((0, n_pad - N), (0, 0)))

    kernel = functools.partial(_rmsnorm_kernel, eps=eps)

    out2d = pl.pallas_call(
        kernel,
        out_shape=jax.ShapeDtypeStruct((n_pad, D), hidden_states.dtype),
        grid_spec=pltpu.PrefetchScalarGridSpec(
            num_scalar_prefetch=0,
            grid=(num_tiles,),
            in_specs=[
                pl.BlockSpec((row_tile, D), lambda i: (i, 0)),
                pl.BlockSpec((1, D), lambda i: (0, 0)),
            ],
            out_specs=pl.BlockSpec((row_tile, D), lambda i: (i, 0)),
        ),
        compiler_params=pltpu.CompilerParams(
            # Row axis is independent -> sharded across TCs on v7x megacore.
            dimension_semantics=("parallel",),
            # 32 MiB is safe on v5e/v6e/v7x; tile budget keeps us well under.
            vmem_limit_bytes=32 * 1024 * 1024,
        ),
    )(x2d, w2d)

    if n_pad != N:
        out2d = out2d[:N]
    return out2d.reshape(orig_shape)


def switch_encoder_final_layer_norm_pipe(
    params,
    encoder_hidden_states,
    encoder_position_bias,
    extended_encoder_attention_mask,
    decoder_input_ids,
    decoder_attention_mask,
    encoder_attention_mask,
    *,
    eps=1e-6,
):
    h = switch_final_layer_norm(
        encoder_hidden_states, params["layer_norm_weight"], eps=eps
    )
    # TODO(synk): nn.Dropout is identity in eval mode; train-mode stochastic
    # dropout would need pltpu.prng_seed + pltpu.stateful_bernoulli.
    return (
        h,
        encoder_position_bias,
        decoder_input_ids,
        decoder_attention_mask,
        encoder_attention_mask,
    )


if __name__ == "__main__":
    # Small config: batch=2, seq=8, d_model=32, n_heads=4
    B, S, D, H = 2, 8, 32, 4
    key = jax.random.PRNGKey(0)
    k1, k2, k3 = jax.random.split(key, 3)

    encoder_hidden_states = jax.random.normal(k1, (B, S, D), dtype=jnp.float32)
    encoder_position_bias = jax.random.normal(k2, (B, H, S, S), dtype=jnp.float32)
    encoder_attention_mask = jnp.ones((B, S), dtype=jnp.int32)
    extended_encoder_attention_mask = jnp.zeros((B, 1, 1, S), dtype=jnp.float32)
    decoder_input_ids = jax.random.randint(k3, (B, S), 0, 100, dtype=jnp.int32)
    decoder_attention_mask = jnp.ones((B, S), dtype=jnp.int32)

    # Deterministic parameter init: T5LayerNorm weight initialized to ones.
    params = {"layer_norm_weight": jnp.ones((D,), dtype=jnp.float32)}

    outs = switch_encoder_final_layer_norm_pipe(
        params,
        encoder_hidden_states,
        encoder_position_bias,
        extended_encoder_attention_mask,
        decoder_input_ids,
        decoder_attention_mask,
        encoder_attention_mask,
        eps=1e-6,
    )
    outs = jax.block_until_ready(outs)

    # Cross-check against pure-JAX reference RMSNorm.
    x = encoder_hidden_states.astype(jnp.float32)
    var = jnp.mean(x * x, axis=-1, keepdims=True)
    ref = (x * jax.lax.rsqrt(var + 1e-6) * params["layer_norm_weight"]).astype(
        encoder_hidden_states.dtype
    )
    assert jnp.allclose(outs[0], ref, atol=1e-5, rtol=1e-5)
    assert outs[1].shape == (B, H, S, S)
    assert outs[2].shape == (B, S)

    # Exercise the uneven / tail path too (N not a multiple of the tile).
    odd = jax.random.normal(key, (3, 5, D), dtype=jnp.float32)
    out_odd = switch_final_layer_norm(odd, params["layer_norm_weight"],
                                      eps=1e-6, row_tile=8)
    xo = odd.astype(jnp.float32)
    vo = jnp.mean(xo * xo, axis=-1, keepdims=True)
    ref_odd = (xo * jax.lax.rsqrt(vo + 1e-6) * params["layer_norm_weight"]).astype(
        odd.dtype
    )
    assert jnp.allclose(jax.block_until_ready(out_odd), ref_odd, atol=1e-5, rtol=1e-5)

    print("KERNEL_OK")
</pallas_src>

<mosaic_0001>
module attributes {stable_mosaic.version = 11 : i64} {
  func.func @_rmsnorm_kernel(%arg0: i32, %arg1: memref<16x32xf32, #tpu.memory_space<vmem>>, %arg2: memref<1x32xf32, #tpu.memory_space<vmem>>, %arg3: memref<16x32xf32, #tpu.memory_space<vmem>>) attributes {dimension_semantics = [#tpu.dimension_semantics<parallel>], iteration_bounds = array<i64: 1>, scalar_prefetch = 0 : i64, scratch_operands = 0 : i64, tpu.core_type = #tpu.core_type<tc>, window_params = [{transform_indices = @transform_0, window_bounds = array<i64: 16, 32>}, {pipeline_mode = #tpu.pipeline_mode<synchronous>, transform_indices = @transform_1, window_bounds = array<i64: 1, 32>}, {transform_indices = @transform_2, window_bounds = array<i64: 16, 32>}]} {
    %c0 = arith.constant 0 : index
    %c0_0 = arith.constant 0 : index
    %0 = vector.load %arg1[%c0, %c0_0] : memref<16x32xf32, #tpu.memory_space<vmem>>, vector<16x32xf32>
    %1 = arith.mulf %0, %0 : vector<16x32xf32>
    %cst = arith.constant dense<0.000000e+00> : vector<16xf32>
    %2 = vector.multi_reduction <add>, %1, %cst [1] : vector<16x32xf32> to vector<16xf32>
    %3 = vector.shape_cast %2 : vector<16xf32> to vector<16x1xf32>
    %cst_1 = arith.constant 3.200000e+01 : f32
    %4 = vector.broadcast %cst_1 : f32 to vector<16x1xf32>
    %5 = arith.divf %3, %4 : vector<16x1xf32>
    %cst_2 = arith.constant 9.99999997E-7 : f32
    %6 = vector.broadcast %cst_2 : f32 to vector<16x1xf32>
    %7 = arith.addf %5, %6 : vector<16x1xf32>
    %8 = math.rsqrt %7 : vector<16x1xf32>
    %9 = vector.broadcast %8 : vector<16x1xf32> to vector<16x32xf32>
    %10 = arith.mulf %0, %9 : vector<16x32xf32>
    %c0_3 = arith.constant 0 : index
    %c0_4 = arith.constant 0 : index
    %11 = vector.load %arg2[%c0_3, %c0_4] : memref<1x32xf32, #tpu.memory_space<vmem>>, vector<1x32xf32>
    %12 = vector.broadcast %11 : vector<1x32xf32> to vector<16x32xf32>
    %13 = arith.mulf %10, %12 : vector<16x32xf32>
    %c0_5 = arith.constant 0 : index
    %c0_6 = arith.constant 0 : index
    %14 = vector.load %arg3[%c0_5, %c0_6] : memref<16x32xf32, #tpu.memory_space<vmem>>, vector<16x32xf32>
    tpu.vector_store %arg3[%c0_5, %c0_6], %13 {strides = array<i32>} : memref<16x32xf32, #tpu.memory_space<vmem>>, vector<16x32xf32>,
    return
  }
  func.func @transform_0(%arg0: i32) -> (i32, i32) {
    %c0_i32 = arith.constant 0 : i32
    %c0_i32_0 = arith.constant 0 : i32
    return %arg0, %c0_i32 : i32, i32
  }
  func.func @transform_1(%arg0: i32) -> (i32, i32) {
    %c0_i32 = arith.constant 0 : i32
    %c0_i32_0 = arith.constant 0 : i32
    %c0_i32_1 = arith.constant 0 : i32
    return %c0_i32, %c0_i32_0 : i32, i32
  }
  func.func @transform_2(%arg0: i32) -> (i32, i32) {
    %c0_i32 = arith.constant 0 : i32
    %c0_i32_0 = arith.constant 0 : i32
    return %arg0, %c0_i32 : i32, i32
  }
}

</mosaic_0001>

<llo_original>
// kernel: tpu_custom_call.1
$region0: #{tpu_custom_call.1}
  #allocation0 [shape = 'u32[]', space=smem, size = 0x4, offset = 0x4, fixed_abs, tag = 'smem constant byte address 0x4 - core index']
  #allocation1 [shape = 'u32[144,128]{1,0:T(1,128)}', space=vmem, size = 0x12000, scoped, tag = 'internal scratch']
  %s0 = inlined_call_operand.hbm [shape: f32[16,32], index: 0, kind: input, shape index: {}]
  %s1 = inlined_call_operand.vmem [shape: f32[1,32], index: 1, kind: input, shape index: {}]
  %s2 = inlined_call_operand.hbm [shape: f32[16,32], index: 2, kind: output, shape index: {}]
  %s3 = sld [smem:[#allocation0]]
  $region22: #{tpu_custom_call.1} parent=0
    _
  %s5 = ssub.s32 1, %s3
  %s6 = scalar_select 0, %s5, %s3
  $region1: #{tpu_custom_call.1} parent=0
    #allocation2 [shape = 'u8[8192]{0}', space=vmem, size = 0x2000, scoped, tag = 'input window, operand 0, single buffered']
    #allocation3 [shape = 's32[1]{0}', space=sflag, size = 0x4, scoped, tag = 'scoped memory for tpu_custom_call.1']
    #allocation4 [shape = 's32[1]{0}', space=sflag, size = 0x4, scoped, tag = 'scoped memory for tpu_custom_call.1']
    #allocation5 [shape = 'u8[8192]{0}', space=vmem, size = 0x2000, scoped, tag = 'output window, operand 0, single buffered']
    %7 = vsyncpa [#allocation3], 0
    %8 = vsyncpa [#allocation4], 0
    // Predicated region
    $region2: #{tpu_custom_call.1} parent=1 // pred_check
      _
    $region3: #{tpu_custom_call.1} parent=1 // pred_check_branch
      %10 = sbr.rel (0) target = $region5
    $region4: #{tpu_custom_call.1} parent=1 // pred_region
      %s12 = ssub.s32 256, 256
      %13 = vsyncadd [#allocation3], %s12
      %s14 = sshll.u32 [#allocation2], 4
      %s15 = int_to_ptr.vmem [resolvable:$true] %s14
      %20 = dma.hbm_to_vmem [thread:$0]  %s0, 256, %s15, [#allocation3], 128, 128, 8
    $region5: #{tpu_custom_call.1} parent=1 // pred_fallthru
      _
    // Predicated region
    $region6: #{tpu_custom_call.1} parent=1 // pred_check
      _
    $region7: #{tpu_custom_call.1} parent=1 // pred_check_branch
      %22 = sbr.rel (0) target = $region9
    $region8: #{tpu_custom_call.1} parent=1 // pred_region
      _
    $region9: #{tpu_custom_call.1} parent=1 // pred_fallthru
      _
    // Predicated region
    $region10: #{tpu_custom_call.1} parent=1 // pred_check
      _
    $region11: #{tpu_custom_call.1} parent=1 // pred_check_branch
      %24 = sbr.rel (0) target = $region13
    $region12: #{tpu_custom_call.1} parent=1 // pred_region
      %25 = dma.done [#allocation3], 256
    $region13: #{tpu_custom_call.1} parent=1 // pred_fallthru
      _
    %v26 = vld [vmem:[#allocation2] sm:$0xff]
    %v27 = vld [vmem:[#allocation2 + $0x8] sm:$0xff]
    %v28 = vmul.f32 %v26, %v26
    %v29 = vmul.f32 %v27, %v27
    %vm30 = vcmask 261120
    %v31 = vsel %vm30, %v28, 0.0
    %32 = vadd.xlane.f32.xlu0 %v31
    %v33 = vpop.xlane.xlu0 %32
    %v34 = vsel %vm30, %v29, 0.0
    %35 = vadd.xlane.f32.xlu0 %v34
    %v36 = vpop.xlane.xlu0 %35
    %v37 = vrcp.pop 32.0
    %v38 = vmul.f32 %v33, %v37
    %v39 = vmul.f32 %v36, %v37
    %v40 = vadd.f32 %v38, 1e-06
    %v41 = vadd.f32 %v39, 1e-06
    %v42 = vrsqrt.pop %v40
    %v43 = vrsqrt.pop %v41
    %v44 = vmul.f32 %v26, %v42
    %v45 = vmul.f32 %v27, %v43
    %v46 = vld [vmem:[%s1] sm:$0x1]
    %v48 = vlaneseq
    %v49 = vshrl.u32 %v48, 7
    %v50 = vsub.s32 0, %v49
    %v51 = vrot.slane %v46, %v50
    %v53 = vmul.f32 %v44, %v51
    %v54 = vmul.f32 %v45, %v51
    %55 = vst.msk [vmem:[#allocation5] sm:$0xff] %vm30, %v53
    %56 = vst.msk [vmem:[#allocation5 + $0x8] sm:$0xff] %vm30, %v54
    // Predicated region
    $region14: #{tpu_custom_call.1} parent=1 // pred_check
      _
    $region15: #{tpu_custom_call.1} parent=1 // pred_check_branch
      %58 = sbr.rel (0) target = $region17
    $region16: #{tpu_custom_call.1} parent=1 // pred_region
      %s60 = ssub.s32 256, 256
      %61 = vsyncadd [#allocation4], %s60
      %s62 = sshll.u32 [#allocation5], 4
      %s63 = int_to_ptr.vmem [resolvable:$true] %s62
      %68 = dma.vmem_to_hbm [thread:$0]  %s63, 256, %s2, [#allocation4], 128, 128, 8
    $region17: #{tpu_custom_call.1} parent=1 // pred_fallthru
      _
    // Predicated region
    $region18: #{tpu_custom_call.1} parent=1 // pred_check
      _
    $region19: #{tpu_custom_call.1} parent=1 // pred_check_branch
      %70 = sbr.rel (0) target = $region21
    $region20: #{tpu_custom_call.1} parent=1 // pred_region
      %71 = dma.done [#allocation4], 256
    $region21: #{tpu_custom_call.1} parent=1 // pred_fallthru
      _
    %72 = vsyncpa [#allocation3], 1
    %73 = vsyncpa [#allocation4], 1

</llo_original>
